<compile_context>
chip_gen: v7x
topology: tpu7x:2x2x1
jax: 0.10.0
libtpu: 0.0.40
codegen_flags: <defaults>
</compile_context>

<pallas_src>
import functools

import jax
import jax.numpy as jnp
from jax.experimental import pallas as pl
from jax.experimental.pallas import tpu as pltpu

_LANE = 128


def _dice_kernel(p_ref, t_ref, loss_ref, num_acc, den_acc, *,
                 smooth, p_exp, rows_total, tile_rows):
    k = pl.program_id(1)  # reduction (row-chunk) axis, innermost

    @pl.when(k == 0)
    def _():
        num_acc[...] = jnp.zeros_like(num_acc)
        den_acc[...] = jnp.zeros_like(den_acc)

    p = p_ref[...].astype(jnp.float32)   # (tile_rows, 128)
    t = t_ref[...].astype(jnp.float32)

    num_part = p * t
    if p_exp == 2:
        den_part = p * p + t * t
    elif p_exp == 1:
        den_part = p + t
    else:
        den_part = jnp.power(p, float(p_exp)) + jnp.power(t, float(p_exp))

    if rows_total % tile_rows != 0:
        # Ragged last chunk: rows past the end of the (B, R, 128) array hold
        # unspecified data; mask them out before accumulating.
        row_ids = jax.lax.broadcasted_iota(jnp.int32, (tile_rows, _LANE), 0)
        valid = (k * tile_rows + row_ids) < rows_total
        num_part = jnp.where(valid, num_part, 0.0)
        den_part = jnp.where(valid, den_part, 0.0)

    # Lane-dense elementwise accumulation; all cross-lane reduction deferred.
    num_acc[...] += num_part
    den_acc[...] += den_part

    @pl.when(k == pl.num_programs(1) - 1)
    def _():
        num = 2.0 * jnp.sum(num_acc[...]) + smooth
        den = jnp.sum(den_acc[...]) + smooth
        loss = 1.0 - num / den
        loss_ref[...] = jnp.full(loss_ref.shape, loss, dtype=loss_ref.dtype)


def binary_dice_loss(predict, target, *, smooth=1e-6, p=2, reduction="mean",
                     target_block_bytes=1 << 20):
    """Pallas implementation of BinaryDiceLoss.forward."""
    assert predict.shape[0] == target.shape[0], (
        f"predict {predict.shape[0]} & target {target.shape[0]} batch size don't match"
    )
    # Zero padding (lane alignment) is only neutral for p >= 1 (default p=2).
    assert p >= 1, "p must be >= 1 (zero padding assumes 0**p == 0)"

    B = predict.shape[0]
    predict = predict.reshape(B, -1)
    target = target.reshape(B, -1)
    D = predict.shape[1]

    # Lane-align D.  When D % 128 == 0 (typical image shapes) the reshape below
    # is a free view; otherwise pad with zeros to the next multiple of 128 only.
    # TODO(synk): in-kernel lane masking would avoid this single padded copy
    # for lane-unaligned D.
    Dp = ((D + _LANE - 1) // _LANE) * _LANE
    if Dp != D:
        pad = Dp - D
        predict = jnp.pad(predict, ((0, 0), (0, pad)))
        target = jnp.pad(target, ((0, 0), (0, pad)))
    R = Dp // _LANE
    predict = predict.reshape(B, R, _LANE)
    target = target.reshape(B, R, _LANE)

    # Tile sizing: ~target_block_bytes per input block (kernel is pure HBM
    # streaming), sublane-aligned (8 rows for 32-bit, 16 for 16-bit dtypes).
    # Footprint: 2 inputs x 2 pipeline buffers x block + 2 f32 accumulators
    # stays well under every generation's scoped-VMEM cap at 1 MiB blocks
    # (~6 MiB total), including v7x's 64 MiB physical VMEM.
    itemsize = max(jnp.dtype(predict.dtype).itemsize,
                   jnp.dtype(target.dtype).itemsize)
    sub_mult = 8 if itemsize >= 4 else 16
    tile_rows = (target_block_bytes // (_LANE * itemsize)) // sub_mult * sub_mult
    tile_rows = max(sub_mult, tile_rows)
    if tile_rows >= R:
        tile_rows = R                      # full rows dim: always legal
    K = pl.cdiv(R, tile_rows)

    kernel = functools.partial(
        _dice_kernel, smooth=float(smooth), p_exp=int(p),
        rows_total=R, tile_rows=tile_rows)

    out = pl.pallas_call(
        kernel,
        out_shape=jax.ShapeDtypeStruct((B, 8, _LANE), jnp.float32),
        grid_spec=pltpu.PrefetchScalarGridSpec(
            num_scalar_prefetch=0,
            grid=(B, K),                    # batch parallel, reduction last
            in_specs=[
                pl.BlockSpec((None, tile_rows, _LANE), lambda b, k: (b, k, 0)),
                pl.BlockSpec((None, tile_rows, _LANE), lambda b, k: (b, k, 0)),
            ],
            out_specs=pl.BlockSpec((None, 8, _LANE), lambda b, k: (b, 0, 0)),
            scratch_shapes=[
                pltpu.VMEM((tile_rows, _LANE), jnp.float32),  # num accumulator
                pltpu.VMEM((tile_rows, _LANE), jnp.float32),  # den accumulator
            ],
        ),
        compiler_params=pltpu.CompilerParams(
            dimension_semantics=("parallel", "arbitrary"),
            vmem_limit_bytes=32 * 1024 * 1024,
        ),
    )(predict, target)

    per_sample = out[:, 0, 0]              # (B,) per-sample dice loss
    if reduction == "mean":
        return jnp.mean(per_sample)
    elif reduction == "sum":
        return jnp.sum(per_sample)
    elif reduction == "none":
        return per_sample
    else:
        raise Exception("Unexpected reduction {}".format(reduction))


def _reference_dice_loss(predict, target, smooth=1e-6, p=2, reduction="mean"):
    B = predict.shape[0]
    pr = predict.reshape(B, -1).astype(jnp.float32)
    tg = target.reshape(B, -1).astype(jnp.float32)
    num = 2.0 * jnp.sum(pr * tg, axis=1) + smooth
    den = jnp.sum(pr ** p + tg ** p, axis=1) + smooth
    loss = 1.0 - num / den
    if reduction == "mean":
        return jnp.mean(loss)
    if reduction == "sum":
        return jnp.sum(loss)
    return loss


if __name__ == "__main__":
    key = jax.random.PRNGKey(0)
    k1, k2, k3, k4 = jax.random.split(key, 4)

    # Test 1: f32 NCHW, lane-aligned D (4*16*16 = 1024), single chunk per sample.
    B, C, H, W = 2, 4, 16, 16
    predict = jax.nn.sigmoid(jax.random.normal(k1, (B, C, H, W), dtype=jnp.float32))
    target = (jax.random.uniform(k2, (B, C, H, W)) > 0.5).astype(jnp.float32)

    loss = jax.block_until_ready(binary_dice_loss(predict, target))
    ref = _reference_dice_loss(predict, target)
    assert jnp.allclose(loss, ref, atol=2e-5, rtol=1e-5), (loss, ref)

    # Test 2: bf16 inputs, lane-unaligned D (pad path) + ragged row chunk
    # (in-kernel mask path), batch > 1 exercising the parallel grid axis.
    B2, C2, H2, W2 = 3, 1, 16, 150          # D = 2400 -> 19 rows of 128
    p2 = jax.nn.sigmoid(jax.random.normal(k3, (B2, C2, H2, W2))).astype(jnp.bfloat16)
    t2 = (jax.random.uniform(k4, (B2, C2, H2, W2)) > 0.5).astype(jnp.bfloat16)

    loss2 = jax.block_until_ready(
        binary_dice_loss(p2, t2, target_block_bytes=16 * 128 * 2))
    ref2 = _reference_dice_loss(p2.astype(jnp.float32), t2.astype(jnp.float32))
    assert jnp.allclose(loss2, ref2, atol=2e-5, rtol=1e-5), (loss2, ref2)

    print("KERNEL_OK")
</pallas_src>

<mosaic_0001>
module attributes {stable_mosaic.version = 11 : i64} {
  func.func @_dice_kernel(%arg0: i32, %arg1: i32, %arg2: memref<1x8x128xf32, #tpu.memory_space<vmem>>, %arg3: memref<1x8x128xf32, #tpu.memory_space<vmem>>, %arg4: memref<1x8x128xf32, #tpu.memory_space<vmem>>, %arg5: memref<8x128xf32, #tpu.memory_space<vmem>>, %arg6: memref<8x128xf32, #tpu.memory_space<vmem>>) attributes {dimension_semantics = [#tpu.dimension_semantics<parallel>, #tpu.dimension_semantics<arbitrary>], iteration_bounds = array<i64: 2, 1>, scalar_prefetch = 0 : i64, scratch_operands = 2 : i64, tpu.core_type = #tpu.core_type<tc>, window_params = [{transform_indices = @transform_0, window_bounds = array<i64: 1, 8, 128>}, {transform_indices = @transform_1, window_bounds = array<i64: 1, 8, 128>}, {transform_indices = @transform_2, window_bounds = array<i64: 1, 8, 128>}]} {
    %c0_i32 = arith.constant 0 : i32
    %0 = arith.cmpi eq, %arg1, %c0_i32 : i32
    %1 = arith.extui %0 : i1 to i32
    %c0_i32_0 = arith.constant 0 : i32
    %2 = arith.cmpi ne, %1, %c0_i32_0 : i32
    scf.if %2 {
      %cst = arith.constant 0.000000e+00 : f32
      %20 = vector.broadcast %cst : f32 to vector<8x128xf32>
      %c0_16 = arith.constant 0 : index
      %c0_17 = arith.constant 0 : index
      %21 = vector.load %arg5[%c0_16, %c0_17] : memref<8x128xf32, #tpu.memory_space<vmem>>, vector<8x128xf32>
      tpu.vector_store %arg5[%c0_16, %c0_17], %20 {strides = array<i32>} : memref<8x128xf32, #tpu.memory_space<vmem>>, vector<8x128xf32>,
      %cst_18 = arith.constant 0.000000e+00 : f32
      %22 = vector.broadcast %cst_18 : f32 to vector<8x128xf32>
      %c0_19 = arith.constant 0 : index
      %c0_20 = arith.constant 0 : index
      %23 = vector.load %arg6[%c0_19, %c0_20] : memref<8x128xf32, #tpu.memory_space<vmem>>, vector<8x128xf32>
      tpu.vector_store %arg6[%c0_19, %c0_20], %22 {strides = array<i32>} : memref<8x128xf32, #tpu.memory_space<vmem>>, vector<8x128xf32>,
    } else {
    }
    %c0 = arith.constant 0 : index
    %c0_1 = arith.constant 0 : index
    %c0_2 = arith.constant 0 : index
    %3 = vector.load %arg2[%c0, %c0_1, %c0_2] : memref<1x8x128xf32, #tpu.memory_space<vmem>>, vector<1x8x128xf32>
    %4 = vector.shape_cast %3 : vector<1x8x128xf32> to vector<8x128xf32>
    %c0_3 = arith.constant 0 : index
    %c0_4 = arith.constant 0 : index
    %c0_5 = arith.constant 0 : index
    %5 = vector.load %arg3[%c0_3, %c0_4, %c0_5] : memref<1x8x128xf32, #tpu.memory_space<vmem>>, vector<1x8x128xf32>
    %6 = vector.shape_cast %5 : vector<1x8x128xf32> to vector<8x128xf32>
    %7 = arith.mulf %4, %6 : vector<8x128xf32>
    %8 = arith.mulf %4, %4 : vector<8x128xf32>
    %9 = arith.mulf %6, %6 : vector<8x128xf32>
    %10 = arith.addf %8, %9 : vector<8x128xf32>
    %c0_6 = arith.constant 0 : index
    %c0_7 = arith.constant 0 : index
    %11 = vector.load %arg5[%c0_6, %c0_7] : memref<8x128xf32, #tpu.memory_space<vmem>>, vector<8x128xf32>
    %12 = arith.addf %11, %7 : vector<8x128xf32>
    %c0_8 = arith.constant 0 : index
    %c0_9 = arith.constant 0 : index
    %13 = vector.load %arg5[%c0_8, %c0_9] : memref<8x128xf32, #tpu.memory_space<vmem>>, vector<8x128xf32>
    tpu.vector_store %arg5[%c0_8, %c0_9], %12 {strides = array<i32>} : memref<8x128xf32, #tpu.memory_space<vmem>>, vector<8x128xf32>,
    %c0_10 = arith.constant 0 : index
    %c0_11 = arith.constant 0 : index
    %14 = vector.load %arg6[%c0_10, %c0_11] : memref<8x128xf32, #tpu.memory_space<vmem>>, vector<8x128xf32>
    %15 = arith.addf %14, %10 : vector<8x128xf32>
    %c0_12 = arith.constant 0 : index
    %c0_13 = arith.constant 0 : index
    %16 = vector.load %arg6[%c0_12, %c0_13] : memref<8x128xf32, #tpu.memory_space<vmem>>, vector<8x128xf32>
    tpu.vector_store %arg6[%c0_12, %c0_13], %15 {strides = array<i32>} : memref<8x128xf32, #tpu.memory_space<vmem>>, vector<8x128xf32>,
    %c0_i32_14 = arith.constant 0 : i32
    %17 = arith.cmpi eq, %arg1, %c0_i32_14 : i32
    %18 = arith.extui %17 : i1 to i32
    %c0_i32_15 = arith.constant 0 : i32
    %19 = arith.cmpi ne, %18, %c0_i32_15 : i32
    scf.if %19 {
      %c0_16 = arith.constant 0 : index
      %c0_17 = arith.constant 0 : index
      %20 = vector.load %arg5[%c0_16, %c0_17] : memref<8x128xf32, #tpu.memory_space<vmem>>, vector<8x128xf32>
      %21 = vector.shape_cast %20 : vector<8x128xf32> to vector<1x8x128xf32>
      %cst = arith.constant dense<0.000000e+00> : vector<1xf32>
      %22 = vector.multi_reduction <add>, %21, %cst [1, 2] : vector<1x8x128xf32> to vector<1xf32>
      %23 = vector.shape_cast %22 : vector<1xf32> to vector<1x1x1xf32>
      %24 = vector.extract %23[0, 0, 0] : f32 from vector<1x1x1xf32>
      %cst_18 = arith.constant 2.000000e+00 : f32
      %25 = arith.mulf %cst_18, %24 : f32
      %cst_19 = arith.constant 9.99999997E-7 : f32
      %26 = arith.addf %25, %cst_19 : f32
      %c0_20 = arith.constant 0 : index
      %c0_21 = arith.constant 0 : index
      %27 = vector.load %arg6[%c0_20, %c0_21] : memref<8x128xf32, #tpu.memory_space<vmem>>, vector<8x128xf32>
      %28 = vector.shape_cast %27 : vector<8x128xf32> to vector<1x8x128xf32>
      %cst_22 = arith.constant dense<0.000000e+00> : vector<1xf32>
      %29 = vector.multi_reduction <add>, %28, %cst_22 [1, 2] : vector<1x8x128xf32> to vector<1xf32>
      %30 = vector.shape_cast %29 : vector<1xf32> to vector<1x1x1xf32>
      %31 = vector.extract %30[0, 0, 0] : f32 from vector<1x1x1xf32>
      %cst_23 = arith.constant 9.99999997E-7 : f32
      %32 = arith.addf %31, %cst_23 : f32
      %33 = arith.divf %26, %32 : f32
      %cst_24 = arith.constant 1.000000e+00 : f32
      %34 = arith.subf %cst_24, %33 : f32
      %35 = vector.broadcast %34 : f32 to vector<8x128xf32>
      %c0_25 = arith.constant 0 : index
      %c0_26 = arith.constant 0 : index
      %c0_27 = arith.constant 0 : index
      %36 = vector.load %arg4[%c0_25, %c0_26, %c0_27] : memref<1x8x128xf32, #tpu.memory_space<vmem>>, vector<1x8x128xf32>
      %37 = vector.shape_cast %36 : vector<1x8x128xf32> to vector<8x128xf32>
      %38 = vector.shape_cast %35 : vector<8x128xf32> to vector<1x8x128xf32>
      tpu.vector_store %arg4[%c0_25, %c0_26, %c0_27], %38 {strides = array<i32>} : memref<1x8x128xf32, #tpu.memory_space<vmem>>, vector<1x8x128xf32>,
    } else {
    }
    return
  }
  func.func @transform_0(%arg0: i32, %arg1: i32) -> (i32, i32, i32) {
    %c0_i32 = arith.constant 0 : i32
    %c0_i32_0 = arith.constant 0 : i32
    return %arg0, %arg1, %c0_i32 : i32, i32, i32
  }
  func.func @transform_1(%arg0: i32, %arg1: i32) -> (i32, i32, i32) {
    %c0_i32 = arith.constant 0 : i32
    %c0_i32_0 = arith.constant 0 : i32
    return %arg0, %arg1, %c0_i32 : i32, i32, i32
  }
  func.func @transform_2(%arg0: i32, %arg1: i32) -> (i32, i32, i32) {
    %c0_i32 = arith.constant 0 : i32
    %c0_i32_0 = arith.constant 0 : i32
    %c0_i32_1 = arith.constant 0 : i32
    return %arg0, %c0_i32, %c0_i32_0 : i32, i32, i32
  }
}

</mosaic_0001>

<llo_original>
// kernel: tpu_custom_call.1
$region0: #{tpu_custom_call.1}
  #allocation0 [shape = 'u32[]', space=smem, size = 0x4, offset = 0x4, fixed_abs, tag = 'smem constant byte address 0x4 - core index']
  #allocation1 [shape = 'u32[144,128]{1,0:T(1,128)}', space=vmem, size = 0x12000, scoped, tag = 'internal scratch']
  #allocation2 [shape = 'f32[8,128]{1,0:T(8,128)}', space=vmem, size = 0x1000, scoped, tag = 'scratch operand']
  #allocation3 [shape = 'f32[8,128]{1,0:T(8,128)}', space=vmem, size = 0x1000, scoped, tag = 'scratch operand']
  %s0 = inlined_call_operand.hbm [shape: f32[2,8,128], index: 0, kind: input, shape index: {}]
  %s1 = inlined_call_operand.hbm [shape: f32[2,8,128], index: 1, kind: input, shape index: {}]
  %s2 = inlined_call_operand.hbm [shape: f32[2,8,128], index: 2, kind: output, shape index: {}]
  %s3 = sld [smem:[#allocation0]]
  $region57: #{tpu_custom_call.1} parent=0
    _
  %s5 = ssub.s32 1, %s3
  %s6 = scalar_select 0, %s5, %s3
  $region1: #{tpu_custom_call.1} parent=0
    #allocation4 [shape = 'u8[8192]{0}', space=vmem, size = 0x2000, scoped, tag = 'input window, operand 0']
    #allocation5 [shape = 's32[2]{0}', space=sflag, size = 0x8, scoped, tag = 'scoped memory for tpu_custom_call.1']
    #allocation6 [shape = 's32[2]{0}', space=sflag, size = 0x8, scoped, tag = 'scoped memory for tpu_custom_call.1']
    #allocation7 [shape = 'u8[8192]{0}', space=vmem, size = 0x2000, scoped, tag = 'input window, operand 1']
    #allocation8 [shape = 's32[2]{0}', space=sflag, size = 0x8, scoped, tag = 'scoped memory for tpu_custom_call.1']
    #allocation9 [shape = 'u8[8192]{0}', space=vmem, size = 0x2000, scoped, tag = 'output window, operand 0']
    %7 = vsyncpa [#allocation5], 0
    %s8 = scalar_lea.sflag [#allocation5], 1
    %9 = vsyncpa %s8, 0
    %10 = vsyncpa [#allocation8], 0
    %s11 = scalar_lea.sflag [#allocation8], 1
    %12 = vsyncpa %s11, 0
    %13 = vsyncpa [#allocation6], 0
    %s14 = scalar_lea.sflag [#allocation6], 1
    %15 = vsyncpa %s14, 0
    loop: start=0, step=1, limit=4
    $region2: #{tpu_custom_call.1} parent=1 // loop_pre_header
      _
    $region3: #{tpu_custom_call.1} parent=1 // loop_header
      %s17 = sphi 0, %s21
      %p18 = scmp.ge.s32.totalorder %s17, 4
      %s24 = sphi 0, %s36
      %s25 = sphi 0, %s32
      %s26 = sphi 0, %s24
      %s27 = sphi 0, %s25
      %s28 = sphi 0, %s26
      %s29 = sphi 0, %s27
      %s41 = sphi 0, %s43
      %s44 = sphi 0, %s41
      %s45 = sphi 0, %s44
      %s61 = sphi 0, %s45
      %s69 = sphi 0, %s71
      %s72 = sphi 0, %s69
      %s73 = sphi 0, %s72
      %s89 = sphi 0, %s73
      %s95 = sphi 0, %s97
      %s98 = sphi 0, %s95
      %s99 = sphi 0, %s98
      %s115 = sphi 0, %s99
    $region4: #{tpu_custom_call.1} parent=1 // loop_header_branch
      %20 = sbr.rel (%p18) target = $region8
    $region5: #{tpu_custom_call.1} parent=1 // loop_body
      %s22 = ssub.s32 %s17, 1
      %s23 = ssub.s32 %s17, 2
      %s30 = sadd.s32 1, %s25
      %p31 = scmp.ge.s32.totalorder %s30, 1
      %s32 = scalar_select %p31, 0, %s30
      %s33 = sadd.s32 1, %s24
      %s34 = scalar_select %p31, %s33, %s24
      %p35 = scmp.ge.s32.totalorder %s34, 2
      %s36 = scalar_select %p35, 0, %s34
      %s37 = ssub.s32 %s24, %s36
      %s38 = ssub.s32 %s25, %s32
      %s39 = sor.u32 %s37, %s38
      %p40 = scmp.eq.s32.totalorder %s39, 0
      %s42 = sadd.s32 %s41, 1
      %s43 = scalar_select %p40, %s41, %s42
      %p46 = pneg %p40
      %p47 = scmp.eq.s32.totalorder %s17, 1
      %p48 = por %p46, %p47
      %p49 = scmp.ne.s32.totalorder %s41, %s44
      %p50 = scmp.eq.s32.totalorder %s17, 0
      %p51 = por %p49, %p50
      %p52 = scmp.ne.s32.totalorder %s41, %s44
      %p53 = scmp.eq.s32.totalorder %s22, 1
      %p54 = por %p52, %p53
      %p55 = scmp.ne.s32.totalorder %s44, %s45
      %p56 = scmp.eq.s32.totalorder %s22, 0
      %p57 = por %p55, %p56
      %p58 = scmp.ne.s32.totalorder %s44, %s45
      %p59 = scmp.eq.s32.totalorder %s23, 1
      %p60 = por %p58, %p59
      %p62 = scmp.ne.s32.totalorder %s45, %s61
      %p63 = scmp.eq.s32.totalorder %s23, 0
      %p64 = por %p62, %p63
      %s65 = ssub.s32 %s24, %s36
      %s66 = ssub.s32 %s25, %s32
      %s67 = sor.u32 %s65, %s66
      %p68 = scmp.eq.s32.totalorder %s67, 0
      %s70 = sadd.s32 %s69, 1
      %s71 = scalar_select %p68, %s69, %s70
      %p74 = pneg %p68
      %p75 = scmp.eq.s32.totalorder %s17, 1
      %p76 = por %p74, %p75
      %p77 = scmp.ne.s32.totalorder %s69, %s72
      %p78 = scmp.eq.s32.totalorder %s17, 0
      %p79 = por %p77, %p78
      %p80 = scmp.ne.s32.totalorder %s69, %s72
      %p81 = scmp.eq.s32.totalorder %s22, 1
      %p82 = por %p80, %p81
      %p83 = scmp.ne.s32.totalorder %s72, %s73
      %p84 = scmp.eq.s32.totalorder %s22, 0
      %p85 = por %p83, %p84
      %p86 = scmp.ne.s32.totalorder %s72, %s73
      %p87 = scmp.eq.s32.totalorder %s23, 1
      %p88 = por %p86, %p87
      %p90 = scmp.ne.s32.totalorder %s73, %s89
      %p91 = scmp.eq.s32.totalorder %s23, 0
      %p92 = por %p90, %p91
      %s93 = ssub.s32 %s24, %s36
      %p94 = scmp.eq.s32.totalorder %s93, 0
      %s96 = sadd.s32 %s95, 1
      %s97 = scalar_select %p94, %s95, %s96
      %p100 = pneg %p94
      %p101 = scmp.eq.s32.totalorder %s17, 1
      %p102 = por %p100, %p101
      %p103 = scmp.ne.s32.totalorder %s95, %s98
      %p104 = scmp.eq.s32.totalorder %s17, 0
      %p105 = por %p103, %p104
      %p106 = scmp.ne.s32.totalorder %s95, %s98
      %p107 = scmp.eq.s32.totalorder %s22, 1
      %p108 = por %p106, %p107
      %p109 = scmp.ne.s32.totalorder %s98, %s99
      %p110 = scmp.eq.s32.totalorder %s22, 0
      %p111 = por %p109, %p110
      %p112 = scmp.ne.s32.totalorder %s98, %s99
      %p113 = scmp.eq.s32.totalorder %s23, 1
      %p114 = por %p112, %p113
      %p116 = scmp.ne.s32.totalorder %s99, %s115
      %p117 = scmp.eq.s32.totalorder %s23, 0
      %p118 = por %p116, %p117
      %p119 = scmp.le.s32.totalorder 1, %s17
      %p120 = scmp.lt.s32.totalorder %s17, 3
      %p121 = pnand %p119, %p120
      %p122 = pneg %p121
      // Predicated region
      $region9: #{tpu_custom_call.1} parent=5 // pred_check
        _
      $region10: #{tpu_custom_call.1} parent=5 // pred_check_branch
        %124 = sbr.rel (%p121) target = $region12
      $region11: #{tpu_custom_call.1} parent=5 // pred_region
        %s125 = ssub.s32 %s17, 1
      $region12: #{tpu_custom_call.1} parent=5 // pred_fallthru
        _
      %p126 = scmp.lt.s32.totalorder %s17, 2
      // Predicated region
      $region13: #{tpu_custom_call.1} parent=5 // pred_check
        %p127 = pneg %p126
      $region14: #{tpu_custom_call.1} parent=5 // pred_check_branch
        %129 = sbr.rel (%p127) target = $region16
      $region15: #{tpu_custom_call.1} parent=5 // pred_region
        // Predicated region
        $region17: #{tpu_custom_call.1} parent=15 // pred_check
          %p130 = pneg %p51
        $region18: #{tpu_custom_call.1} parent=15 // pred_check_branch
          %132 = sbr.rel (%p130) target = $region20
        $region19: #{tpu_custom_call.1} parent=15 // pred_region
          %s133 = sand.u32 %s41, 1
          %s134 = scalar_lea.sflag [#allocation5], %s133
          %s135 = sand.u32 %s41, 1
          %s136 = smul.addr %s135, 8
          %s137 = scalar_lea.vmem [#allocation4], %s136
          %s139 = ssub.s32 128, 128
          %140 = vsyncadd %s134, %s139
          %s141 = sadd.s32 %s25, %s24
          %s142 = smul.addr %s141, 128
          %s143 = scalar_lea.hbm %s0, %s142
          %s145 = sshll.u32 %s137, 4
          %s146 = int_to_ptr.vmem [resolvable:$true] %s145
          %148 = dma.hbm_to_vmem [thread:$0]  %s143, 128, %s146, %s134
        $region20: #{tpu_custom_call.1} parent=15 // pred_fallthru
          _
        // Predicated region
        $region21: #{tpu_custom_call.1} parent=15 // pred_check
          %p149 = pneg %p79
        $region22: #{tpu_custom_call.1} parent=15 // pred_check_branch
          %151 = sbr.rel (%p149) target = $region24
        $region23: #{tpu_custom_call.1} parent=15 // pred_region
          %s152 = sand.u32 %s69, 1
          %s153 = scalar_lea.sflag [#allocation8], %s152
          %s154 = sand.u32 %s69, 1
          %s155 = smul.addr %s154, 8
          %s156 = scalar_lea.vmem [#allocation7], %s155
          %s158 = ssub.s32 128, 128
          %159 = vsyncadd %s153, %s158
          %s160 = sadd.s32 %s25, %s24
          %s161 = smul.addr %s160, 128
          %s162 = scalar_lea.hbm %s1, %s161
          %s164 = sshll.u32 %s156, 4
          %s165 = int_to_ptr.vmem [resolvable:$true] %s164
          %167 = dma.hbm_to_vmem [thread:$0]  %s162, 128, %s165, %s153
        $region24: #{tpu_custom_call.1} parent=15 // pred_fallthru
          _
      $region16: #{tpu_custom_call.1} parent=5 // pred_fallthru
        _
      %p168 = scmp.le.s32.totalorder 1, %s17
      %p169 = scmp.lt.s32.totalorder %s17, 3
      %p170 = pnand %p168, %p169
      %p171 = pneg %p170
      // Predicated region
      $region25: #{tpu_custom_call.1} parent=5 // pred_check
        _
      $region26: #{tpu_custom_call.1} parent=5 // pred_check_branch
        %173 = sbr.rel (%p170) target = $region28
      $region27: #{tpu_custom_call.1} parent=5 // pred_region
        %s174 = ssub.s32 %s17, 1
        %s175 = sand.u32 %s44, 1
        %s176 = scalar_lea.sflag [#allocation5], %s175
        %s177 = sand.u32 %s44, 1
        %s178 = smul.addr %s177, 8
        %s179 = scalar_lea.vmem [#allocation4], %s178
        // Predicated region
        $region29: #{tpu_custom_call.1} parent=27 // pred_check
          %p180 = pneg %p57
        $region30: #{tpu_custom_call.1} parent=27 // pred_check_branch
          %182 = sbr.rel (%p180) target = $region32
        $region31: #{tpu_custom_call.1} parent=27 // pred_region
          %183 = dma.done %s176, 128
        $region32: #{tpu_custom_call.1} parent=27 // pred_fallthru
          _
        %s184 = sand.u32 %s72, 1
        %s185 = scalar_lea.sflag [#allocation8], %s184
        %s186 = sand.u32 %s72, 1
        %s187 = smul.addr %s186, 8
        %s188 = scalar_lea.vmem [#allocation7], %s187
        // Predicated region
        $region33: #{tpu_custom_call.1} parent=27 // pred_check
          %p189 = pneg %p85
        $region34: #{tpu_custom_call.1} parent=27 // pred_check_branch
          %191 = sbr.rel (%p189) target = $region36
        $region35: #{tpu_custom_call.1} parent=27 // pred_region
          %192 = dma.done %s185, 128
        $region36: #{tpu_custom_call.1} parent=27 // pred_fallthru
          _
        %s193 = sand.u32 %s44, 1
        %s194 = scalar_lea.sflag [#allocation5], %s193
        %s195 = sand.u32 %s44, 1
        %s196 = smul.addr %s195, 8
        %s197 = scalar_lea.vmem [#allocation4], %s196
        %p198 = pneg %p57
        %p199 = pneg %p54
        %s200 = sand.u32 %s72, 1
        %s201 = scalar_lea.sflag [#allocation8], %s200
        %s202 = sand.u32 %s72, 1
        %s203 = smul.addr %s202, 8
        %s204 = scalar_lea.vmem [#allocation7], %s203
        %p205 = pneg %p85
        %p206 = pneg %p82
        %p207 = pneg %p111
        %p208 = pneg %p108
        %s209 = sand.u32 %s98, 1
        %s210 = scalar_lea.sflag [#allocation6], %s209
        %s211 = sand.u32 %s98, 1
        %s212 = smul.addr %s211, 8
        %s213 = scalar_lea.vmem [#allocation9], %s212
        %p214 = scmp.eq.s32.totalorder %s27, 0
        // Predicated region
        $region37: #{tpu_custom_call.1} parent=27 // pred_check
          %p215 = pneg %p214
        $region38: #{tpu_custom_call.1} parent=27 // pred_check_branch
          %217 = sbr.rel (%p215) target = $region40
        $region39: #{tpu_custom_call.1} parent=27 // pred_region
          %218 = vst [vmem:[#allocation2] sm:$0xff] 0.0
          %219 = vst [vmem:[#allocation3] sm:$0xff] 0.0
        $region40: #{tpu_custom_call.1} parent=27 // pred_fallthru
          _
        %v220 = vld [vmem:[%s179] sm:$0xff]
        %v221 = vld [vmem:[%s188] sm:$0xff]
        %v222 = vmul.f32 %v220, %v221
        %v223 = vmul.f32 %v220, %v220
        %v224 = vmul.f32 %v221, %v221
        %v225 = vadd.f32 %v223, %v224
        %v226 = vld [vmem:[#allocation2] sm:$0xff]
        %v227 = vadd.f32 %v226, %v222
        %228 = vst [vmem:[#allocation2] sm:$0xff] %v227
        %v229 = vld [vmem:[#allocation3] sm:$0xff]
        %v230 = vadd.f32 %v229, %v225
        %231 = vst [vmem:[#allocation3] sm:$0xff] %v230
        // Predicated region
        $region41: #{tpu_custom_call.1} parent=27 // pred_check
          %p232 = pneg %p214
        $region42: #{tpu_custom_call.1} parent=27 // pred_check_branch
          %234 = sbr.rel (%p232) target = $region44
        $region43: #{tpu_custom_call.1} parent=27 // pred_region
          %v235 = vld [vmem:[#allocation2] sm:$0xff]
          %236 = vadd.xlane.f32.xlu0 %v235
          %v237 = vpop.xlane.xlu0 %236
          %v238 = vrot.slane %v237, 4
          %v239 = vadd.f32 %v237, %v238
          %v240 = vrot.slane %v239, 2
          %v241 = vadd.f32 %v239, %v240
          %v242 = vrot.slane %v241, 1
          %v243 = vadd.f32 %v241, %v242
          %s244 = vtos %v243
          %s245 = smul.f32 %s244, 2.0
          %s246 = sadd.f32 %s245, 1e-06
          %v247 = vld [vmem:[#allocation3] sm:$0xff]
          %248 = vadd.xlane.f32.xlu0 %v247
          %v249 = vpop.xlane.xlu0 %248
          %v250 = vrot.slane %v249, 4
          %v251 = vadd.f32 %v249, %v250
          %v252 = vrot.slane %v251, 2
          %v253 = vadd.f32 %v251, %v252
          %v254 = vrot.slane %v253, 1
          %v255 = vadd.f32 %v253, %v254
          %s256 = vtos %v255
          %s257 = sadd.f32 %s256, 1e-06
          %v258 = vstv %s257
          %v259 = vrcp.pop %v258
          %s260 = vtos %v259
          %s261 = smul.f32 %s246, %s260
          %s262 = ssub.f32 1.0, %s261
          %v263 = vstv %s262
          %264 = vst [vmem:[%s213] sm:$0xff] %v263
        $region44: #{tpu_custom_call.1} parent=27 // pred_fallthru
          _
        %s265 = sand.u32 %s98, 1
        %s266 = scalar_lea.sflag [#allocation6], %s265
        %s267 = sand.u32 %s98, 1
        %s268 = smul.addr %s267, 8
        %s269 = scalar_lea.vmem [#allocation9], %s268
        // Predicated region
        $region45: #{tpu_custom_call.1} parent=27 // pred_check
          %p270 = pneg %p108
        $region46: #{tpu_custom_call.1} parent=27 // pred_check_branch
          %272 = sbr.rel (%p270) target = $region48
        $region47: #{tpu_custom_call.1} parent=27 // pred_region
          %s274 = ssub.s32 128, 128
          %275 = vsyncadd %s266, %s274
          %s276 = smul.addr %s26, 128
          %s277 = scalar_lea.hbm %s2, %s276
          %s279 = sshll.u32 %s269, 4
          %s280 = int_to_ptr.vmem [resolvable:$true] %s279
          %282 = dma.vmem_to_hbm [thread:$0]  %s280, 128, %s277, %s266
        $region48: #{tpu_custom_call.1} parent=27 // pred_fallthru
          _
      $region28: #{tpu_custom_call.1} parent=5 // pred_fallthru
        _
      %p283 = scmp.le.s32.totalorder 2, %s17
      // Predicated region
      $region49: #{tpu_custom_call.1} parent=5 // pred_check
        %p284 = pneg %p283
      $region50: #{tpu_custom_call.1} parent=5 // pred_check_branch
        %286 = sbr.rel (%p284) target = $region52
      $region51: #{tpu_custom_call.1} parent=5 // pred_region
        %s287 = ssub.s32 %s17, 2
        // Predicated region
        $region53: #{tpu_custom_call.1} parent=51 // pred_check
          %p288 = pneg %p114
        $region54: #{tpu_custom_call.1} parent=51 // pred_check_branch
          %290 = sbr.rel (%p288) target = $region56
        $region55: #{tpu_custom_call.1} parent=51 // pred_region
          %s291 = sand.u32 %s99, 1
          %s292 = scalar_lea.sflag [#allocation6], %s291
          %s293 = sand.u32 %s99, 1
          %s294 = smul.addr %s293, 8
          %s295 = scalar_lea.vmem [#allocation9], %s294
          %296 = dma.done %s292, 128
        $region56: #{tpu_custom_call.1} parent=51 // pred_fallthru
          _
      $region52: #{tpu_custom_call.1} parent=5 // pred_fallthru
        _
    $region6: #{tpu_custom_call.1} parent=1 // loop_footer
      %s21 = sadd.s32 1, %s17
    $region7: #{tpu_custom_call.1} parent=1 // loop_footer_branch
      %16 = sbr.rel target = $region3
    $region8: #{tpu_custom_call.1} parent=1 // loop_exit
      _
    %297 = vsyncpa [#allocation5], 1
    %s298 = scalar_lea.sflag [#allocation5], 1
    %299 = vsyncpa %s298, 1
    %300 = vsyncpa [#allocation8], 1
    %s301 = scalar_lea.sflag [#allocation8], 1
    %302 = vsyncpa %s301, 1
    %303 = vsyncpa [#allocation6], 1
    %s304 = scalar_lea.sflag [#allocation6], 1
    %305 = vsyncpa %s304, 1

</llo_original>
